<compile_context>
chip_gen: v5e
topology: v5e:2x2
jax: 0.10.0
libtpu: 0.0.40
codegen_flags: <defaults>
</compile_context>

<pallas_src>
import functools

import jax
import jax.numpy as jnp
from jax.experimental import pallas as pl
from jax.experimental.pallas import tpu as pltpu


def _pool_mlp_kernel(x_ref, w1_ref, b1_ref, w2_ref, b2_ref, scale_ref,
                     sum_sc, max_sc, *, hw_total):
    """Accumulate avg/max pools over HW tiles; on the last tile run the MLP.

    x block: (1, C, THW) -- channels on sublanes, HW on lanes.
    w*: (C_out, C_in) 1x1-conv weights (untransposed).  b*: (C, 1).
    scale out block: (1, C, 1) f32.
    """
    h = pl.program_id(1)
    xb = x_ref[0]                                             # (C, THW)

    @pl.when(h == 0)
    def _init():
        sum_sc[...] = jnp.zeros_like(sum_sc)
        max_sc[...] = jnp.full_like(max_sc, -jnp.inf)

    # f32 accumulation only for the sum path (lane/XLU reduction); the max is
    # exact in the input dtype, so no full-tile f32 copy is materialized.
    sum_sc[...] += jnp.sum(xb.astype(jnp.float32), axis=1, keepdims=True)
    max_sc[...] = jnp.maximum(
        max_sc[...], jnp.max(xb, axis=1, keepdims=True).astype(jnp.float32))

    @pl.when(h == pl.num_programs(1) - 1)
    def _finalize():
        C = sum_sc.shape[0]
        p_avg = sum_sc[...] * jnp.float32(1.0 / hw_total)     # (C, 1)
        p_max = max_sc[...]                                   # (C, 1)
        # Batch both pooled vectors through the MLP as one (C, 2) matrix:
        # column 0 = avg branch, column 1 = max branch.
        col = jax.lax.broadcasted_iota(jnp.int32, (C, 2), 1)
        p = jnp.where(col == 0, p_avg, p_max)                 # (C, 2)

        w1 = w1_ref[...].astype(jnp.float32)                  # (C, C)
        b1 = b1_ref[...].astype(jnp.float32)                  # (C, 1)
        w2 = w2_ref[...].astype(jnp.float32)
        b2 = b2_ref[...].astype(jnp.float32)

        hid = jnp.dot(w1, p, preferred_element_type=jnp.float32) + b1
        hid = jnp.maximum(hid, 0.0)                           # ReLU
        out = jnp.dot(w2, hid, preferred_element_type=jnp.float32) + b2
        logits = out[:, 0:1] + out[:, 1:2]                    # avg + max branch
        scale_ref[0] = jax.nn.sigmoid(logits)                 # (C, 1) f32


def _rescale_kernel(x_ref, scale_ref, o_ref):
    # x block (1, C, THW); scale block (1, C, 1) broadcast over lanes (HW).
    s = scale_ref[0].astype(x_ref.dtype)                      # (C, 1)
    o_ref[0] = (x_ref[0] * s).astype(o_ref.dtype)


def _pick_hw_tile(hw):
    for t in (2048, 1024, 512, 256, 128):
        if hw % t == 0:
            return t
    return hw  # fall back to the full (untiled) spatial extent


def _vmem_limit(nbytes):
    # Requested scoped VMEM: enough for the double-buffered blocks + headroom,
    # clamped to stay within v7x's 64 MiB physical VMEM.
    return int(min(max(nbytes + (4 << 20), 32 << 20), 64 << 20))


def channel_attention(x_nchw, w1, b1, w2, b2):
    """x_nchw: (B, C, H, W);  w*: (C_out, C_in) 1x1-conv weights;  b*: (C,)."""
    B, C, H, W = x_nchw.shape
    HW = H * W

    # Free reshape of a contiguous NCHW array -- NO transpose, no extra HBM pass.
    x = x_nchw.reshape(B, C, HW)

    thw = _pick_hw_tile(HW)
    n_hw = HW // thw

    b1c = b1.reshape(C, 1)
    b2c = b2.reshape(C, 1)

    blk_bytes = C * thw * x.dtype.itemsize
    w_bytes = 2 * C * C * w1.dtype.itemsize

    # ---- Pass 1: fused avg/max pool + 2-layer 1x1-conv MLP + sigmoid --------
    scale = pl.pallas_call(
        functools.partial(_pool_mlp_kernel, hw_total=HW),
        out_shape=jax.ShapeDtypeStruct((B, C, 1), jnp.float32),
        grid_spec=pltpu.PrefetchScalarGridSpec(
            num_scalar_prefetch=0,
            grid=(B, n_hw),
            in_specs=[
                pl.BlockSpec((1, C, thw), lambda b, h: (b, 0, h)),  # x
                pl.BlockSpec((C, C), lambda b, h: (0, 0)),          # w1
                pl.BlockSpec((C, 1), lambda b, h: (0, 0)),          # b1
                pl.BlockSpec((C, C), lambda b, h: (0, 0)),          # w2
                pl.BlockSpec((C, 1), lambda b, h: (0, 0)),          # b2
            ],
            out_specs=pl.BlockSpec((1, C, 1), lambda b, h: (b, 0, 0)),
            scratch_shapes=[pltpu.VMEM((C, 1), jnp.float32),        # sum acc
                            pltpu.VMEM((C, 1), jnp.float32)],       # max acc
        ),
        compiler_params=pltpu.CompilerParams(
            dimension_semantics=("parallel", "arbitrary"),
            vmem_limit_bytes=_vmem_limit(2 * blk_bytes + 2 * w_bytes)),
    )(x, w1, b1c, w2, b2c)

    # ---- Pass 2: bandwidth-bound rescale, lane-dense HW tiles ---------------
    out = pl.pallas_call(
        _rescale_kernel,
        out_shape=jax.ShapeDtypeStruct((B, C, HW), x.dtype),
        grid_spec=pltpu.PrefetchScalarGridSpec(
            num_scalar_prefetch=0,
            grid=(B, n_hw),
            in_specs=[
                pl.BlockSpec((1, C, thw), lambda b, h: (b, 0, h)),  # x
                pl.BlockSpec((1, C, 1), lambda b, h: (b, 0, 0)),    # scale
            ],
            out_specs=pl.BlockSpec((1, C, thw), lambda b, h: (b, 0, h)),
        ),
        compiler_params=pltpu.CompilerParams(
            dimension_semantics=("parallel", "parallel"),
            vmem_limit_bytes=_vmem_limit(4 * blk_bytes)),
    )(x, scale)

    return out.reshape(B, C, H, W)


def _reference(x, w1, b1, w2, b2):
    # Pure-JAX reference mirroring the PyTorch forward (NCHW).
    p_avg = jnp.mean(x, axis=(2, 3), keepdims=True)            # (B,C,1,1)
    p_max = jnp.max(x, axis=(2, 3), keepdims=True)

    def mlp(p):
        p = p[:, :, 0, 0]                                      # (B, C)
        h = jnp.maximum(p @ w1.T + b1, 0.0)
        o = h @ w2.T + b2
        return o[:, :, None, None]                             # (B,C,1,1)

    scale = jax.nn.sigmoid(mlp(p_avg) + mlp(p_max))
    return x * scale


if __name__ == "__main__":
    B, C, H, W = 2, 4, 16, 16
    key = jax.random.PRNGKey(0)
    kx, k1, k2, k3, k4 = jax.random.split(key, 5)

    x = jax.random.normal(kx, (B, C, H, W), dtype=jnp.float32)

    # Deterministic params mimicking nn.Conv2d(C, C, 1) init scale
    # (kaiming-uniform bound = 1/sqrt(fan_in), fan_in = C*1*1).
    bound = 1.0 / jnp.sqrt(jnp.float32(C))
    w1 = jax.random.uniform(k1, (C, C), minval=-bound, maxval=bound)
    b1 = jax.random.uniform(k2, (C,), minval=-bound, maxval=bound)
    w2 = jax.random.uniform(k3, (C, C), minval=-bound, maxval=bound)
    b2 = jax.random.uniform(k4, (C,), minval=-bound, maxval=bound)

    out = jax.block_until_ready(channel_attention(x, w1, b1, w2, b2))
    ref = jax.block_until_ready(_reference(x, w1, b1, w2, b2))

    assert out.shape == (B, C, H, W), out.shape
    assert jnp.allclose(out, ref, atol=1e-5, rtol=1e-5), (
        float(jnp.max(jnp.abs(out - ref))))
    print("KERNEL_OK")
</pallas_src>

<mosaic_0001>
module attributes {stable_mosaic.version = 11 : i64} {
  func.func @_pool_mlp_kernel(%arg0: i32, %arg1: i32, %arg2: memref<1x4x256xf32, #tpu.memory_space<vmem>>, %arg3: memref<4x4xf32, #tpu.memory_space<vmem>>, %arg4: memref<4x1xf32, #tpu.memory_space<vmem>>, %arg5: memref<4x4xf32, #tpu.memory_space<vmem>>, %arg6: memref<4x1xf32, #tpu.memory_space<vmem>>, %arg7: memref<1x4x1xf32, #tpu.memory_space<vmem>>, %arg8: memref<4x1xf32, #tpu.memory_space<vmem>>, %arg9: memref<4x1xf32, #tpu.memory_space<vmem>>) attributes {dimension_semantics = [#tpu.dimension_semantics<parallel>, #tpu.dimension_semantics<arbitrary>], iteration_bounds = array<i64: 2, 1>, scalar_prefetch = 0 : i64, scratch_operands = 2 : i64, tpu.core_type = #tpu.core_type<tc>, window_params = [{transform_indices = @transform_0, window_bounds = array<i64: 1, 4, 256>}, {pipeline_mode = #tpu.pipeline_mode<synchronous>, transform_indices = @transform_1, window_bounds = array<i64: 4, 4>}, {pipeline_mode = #tpu.pipeline_mode<synchronous>, transform_indices = @transform_2, window_bounds = array<i64: 4, 1>}, {pipeline_mode = #tpu.pipeline_mode<synchronous>, transform_indices = @transform_3, window_bounds = array<i64: 4, 4>}, {pipeline_mode = #tpu.pipeline_mode<synchronous>, transform_indices = @transform_4, window_bounds = array<i64: 4, 1>}, {transform_indices = @transform_5, window_bounds = array<i64: 1, 4, 1>}]} {
    %c0 = arith.constant 0 : index
    %c0_0 = arith.constant 0 : index
    %c0_1 = arith.constant 0 : index
    %0 = vector.load %arg2[%c0, %c0_0, %c0_1] : memref<1x4x256xf32, #tpu.memory_space<vmem>>, vector<1x4x256xf32>
    %1 = vector.shape_cast %0 : vector<1x4x256xf32> to vector<4x256xf32>
    %c0_i32 = arith.constant 0 : i32
    %2 = arith.cmpi eq, %arg1, %c0_i32 : i32
    %3 = arith.extui %2 : i1 to i32
    %c0_i32_2 = arith.constant 0 : i32
    %4 = arith.cmpi ne, %3, %c0_i32_2 : i32
    scf.if %4 {
      %cst_14 = arith.constant 0.000000e+00 : f32
      %18 = vector.broadcast %cst_14 : f32 to vector<4x1xf32>
      %c0_15 = arith.constant 0 : index
      %c0_16 = arith.constant 0 : index
      %19 = vector.load %arg8[%c0_15, %c0_16] : memref<4x1xf32, #tpu.memory_space<vmem>>, vector<4x1xf32>
      tpu.vector_store %arg8[%c0_15, %c0_16], %18 {strides = array<i32>} : memref<4x1xf32, #tpu.memory_space<vmem>>, vector<4x1xf32>,
      %cst_17 = arith.constant 0xFF800000 : f32
      %20 = vector.broadcast %cst_17 : f32 to vector<4x1xf32>
      %c0_18 = arith.constant 0 : index
      %c0_19 = arith.constant 0 : index
      %21 = vector.load %arg9[%c0_18, %c0_19] : memref<4x1xf32, #tpu.memory_space<vmem>>, vector<4x1xf32>
      tpu.vector_store %arg9[%c0_18, %c0_19], %20 {strides = array<i32>} : memref<4x1xf32, #tpu.memory_space<vmem>>, vector<4x1xf32>,
    } else {
    }
    %c0_3 = arith.constant 0 : index
    %c0_4 = arith.constant 0 : index
    %5 = vector.load %arg8[%c0_3, %c0_4] : memref<4x1xf32, #tpu.memory_space<vmem>>, vector<4x1xf32>
    %cst = arith.constant dense<0.000000e+00> : vector<4xf32>
    %6 = vector.multi_reduction <add>, %1, %cst [1] : vector<4x256xf32> to vector<4xf32>
    %7 = vector.shape_cast %6 : vector<4xf32> to vector<4x1xf32>
    %8 = arith.addf %5, %7 : vector<4x1xf32>
    %c0_5 = arith.constant 0 : index
    %c0_6 = arith.constant 0 : index
    %9 = vector.load %arg8[%c0_5, %c0_6] : memref<4x1xf32, #tpu.memory_space<vmem>>, vector<4x1xf32>
    tpu.vector_store %arg8[%c0_5, %c0_6], %8 {strides = array<i32>} : memref<4x1xf32, #tpu.memory_space<vmem>>, vector<4x1xf32>,
    %c0_7 = arith.constant 0 : index
    %c0_8 = arith.constant 0 : index
    %10 = vector.load %arg9[%c0_7, %c0_8] : memref<4x1xf32, #tpu.memory_space<vmem>>, vector<4x1xf32>
    %cst_9 = arith.constant dense<0xFF800000> : vector<4xf32>
    %11 = vector.multi_reduction <maximumf>, %1, %cst_9 [1] : vector<4x256xf32> to vector<4xf32>
    %12 = vector.shape_cast %11 : vector<4xf32> to vector<4x1xf32>
    %13 = arith.maximumf %10, %12 : vector<4x1xf32>
    %c0_10 = arith.constant 0 : index
    %c0_11 = arith.constant 0 : index
    %14 = vector.load %arg9[%c0_10, %c0_11] : memref<4x1xf32, #tpu.memory_space<vmem>>, vector<4x1xf32>
    tpu.vector_store %arg9[%c0_10, %c0_11], %13 {strides = array<i32>} : memref<4x1xf32, #tpu.memory_space<vmem>>, vector<4x1xf32>,
    %c0_i32_12 = arith.constant 0 : i32
    %15 = arith.cmpi eq, %arg1, %c0_i32_12 : i32
    %16 = arith.extui %15 : i1 to i32
    %c0_i32_13 = arith.constant 0 : i32
    %17 = arith.cmpi ne, %16, %c0_i32_13 : i32
    scf.if %17 {
      %c0_14 = arith.constant 0 : index
      %c0_15 = arith.constant 0 : index
      %18 = vector.load %arg8[%c0_14, %c0_15] : memref<4x1xf32, #tpu.memory_space<vmem>>, vector<4x1xf32>
      %cst_16 = arith.constant 3.906250e-03 : f32
      %19 = vector.broadcast %cst_16 : f32 to vector<4x1xf32>
      %20 = arith.mulf %18, %19 : vector<4x1xf32>
      %c0_17 = arith.constant 0 : index
      %c0_18 = arith.constant 0 : index
      %21 = vector.load %arg9[%c0_17, %c0_18] : memref<4x1xf32, #tpu.memory_space<vmem>>, vector<4x1xf32>
      %22 = tpu.iota {dimensions = array<i32: 1>} : vector<4x2xi32>
      %c0_i32_19 = arith.constant 0 : i32
      %23 = vector.broadcast %c0_i32_19 : i32 to vector<4x2xi32>
      %24 = arith.cmpi eq, %22, %23 : vector<4x2xi32>
      %25 = vector.shape_cast %20 : vector<4x1xf32> to vector<4x1xf32>
      %26 = vector.broadcast %25 : vector<4x1xf32> to vector<4x2xf32>
      %27 = vector.shape_cast %21 : vector<4x1xf32> to vector<4x1xf32>
      %28 = vector.broadcast %27 : vector<4x1xf32> to vector<4x2xf32>
      %29 = arith.select %24, %26, %28 : vector<4x2xi1>, vector<4x2xf32>
      %c0_20 = arith.constant 0 : index
      %c0_21 = arith.constant 0 : index
      %30 = vector.load %arg3[%c0_20, %c0_21] : memref<4x4xf32, #tpu.memory_space<vmem>>, vector<4x4xf32>
      %c0_22 = arith.constant 0 : index
      %c0_23 = arith.constant 0 : index
      %31 = vector.load %arg4[%c0_22, %c0_23] : memref<4x1xf32, #tpu.memory_space<vmem>>, vector<4x1xf32>
      %c0_24 = arith.constant 0 : index
      %c0_25 = arith.constant 0 : index
      %32 = vector.load %arg5[%c0_24, %c0_25] : memref<4x4xf32, #tpu.memory_space<vmem>>, vector<4x4xf32>
      %c0_26 = arith.constant 0 : index
      %c0_27 = arith.constant 0 : index
      %33 = vector.load %arg6[%c0_26, %c0_27] : memref<4x1xf32, #tpu.memory_space<vmem>>, vector<4x1xf32>
      %cst_28 = arith.constant dense<0.000000e+00> : vector<4x2xf32>
      %34 = tpu.matmul %30, %29, %cst_28 {dimension_numbers = #tpu.dot_dimension_numbers<[1], [0], [0], [1], [0, 0, 1, 1], [], []>} : vector<4x4xf32>, vector<4x2xf32>, vector<4x2xf32> -> vector<4x2xf32>
      %35 = vector.broadcast %31 : vector<4x1xf32> to vector<4x2xf32>
      %36 = arith.addf %34, %35 : vector<4x2xf32>
      %cst_29 = arith.constant 0.000000e+00 : f32
      %37 = vector.broadcast %cst_29 : f32 to vector<4x2xf32>
      %38 = arith.maximumf %36, %37 : vector<4x2xf32>
      %cst_30 = arith.constant dense<0.000000e+00> : vector<4x2xf32>
      %39 = tpu.matmul %32, %38, %cst_30 {dimension_numbers = #tpu.dot_dimension_numbers<[1], [0], [0], [1], [0, 0, 1, 1], [], []>} : vector<4x4xf32>, vector<4x2xf32>, vector<4x2xf32> -> vector<4x2xf32>
      %40 = vector.broadcast %33 : vector<4x1xf32> to vector<4x2xf32>
      %41 = arith.addf %39, %40 : vector<4x2xf32>
      %42 = vector.extract_strided_slice %41 {offsets = [0, 0], sizes = [4, 1], strides = [1, 1]} : vector<4x2xf32> to vector<4x1xf32>
      %43 = vector.extract_strided_slice %41 {offsets = [0, 1], sizes = [4, 1], strides = [1, 1]} : vector<4x2xf32> to vector<4x1xf32>
      %44 = arith.addf %42, %43 : vector<4x1xf32>
      %45 = arith.negf %44 : vector<4x1xf32>
      %46 = math.exp %45 : vector<4x1xf32>
      %cst_31 = arith.constant 1.000000e+00 : f32
      %47 = vector.broadcast %cst_31 : f32 to vector<4x1xf32>
      %48 = arith.addf %47, %46 : vector<4x1xf32>
      %49 = arith.divf %47, %48 : vector<4x1xf32>
      %c0_32 = arith.constant 0 : index
      %c0_33 = arith.constant 0 : index
      %c0_34 = arith.constant 0 : index
      %50 = vector.load %arg7[%c0_32, %c0_33, %c0_34] : memref<1x4x1xf32, #tpu.memory_space<vmem>>, vector<1x4x1xf32>
      %51 = vector.shape_cast %50 : vector<1x4x1xf32> to vector<4x1xf32>
      %52 = vector.shape_cast %49 : vector<4x1xf32> to vector<1x4x1xf32>
      tpu.vector_store %arg7[%c0_32, %c0_33, %c0_34], %52 {strides = array<i32>} : memref<1x4x1xf32, #tpu.memory_space<vmem>>, vector<1x4x1xf32>,
    } else {
    }
    return
  }
  func.func @transform_0(%arg0: i32, %arg1: i32) -> (i32, i32, i32) {
    %c0_i32 = arith.constant 0 : i32
    %c0_i32_0 = arith.constant 0 : i32
    return %arg0, %c0_i32, %arg1 : i32, i32, i32
  }
  func.func @transform_1(%arg0: i32, %arg1: i32) -> (i32, i32) {
    %c0_i32 = arith.constant 0 : i32
    %c0_i32_0 = arith.constant 0 : i32
    %c0_i32_1 = arith.constant 0 : i32
    return %c0_i32, %c0_i32_0 : i32, i32
  }
  func.func @transform_2(%arg0: i32, %arg1: i32) -> (i32, i32) {
    %c0_i32 = arith.constant 0 : i32
    %c0_i32_0 = arith.constant 0 : i32
    %c0_i32_1 = arith.constant 0 : i32
    return %c0_i32, %c0_i32_0 : i32, i32
  }
  func.func @transform_3(%arg0: i32, %arg1: i32) -> (i32, i32) {
    %c0_i32 = arith.constant 0 : i32
    %c0_i32_0 = arith.constant 0 : i32
    %c0_i32_1 = arith.constant 0 : i32
    return %c0_i32, %c0_i32_0 : i32, i32
  }
  func.func @transform_4(%arg0: i32, %arg1: i32) -> (i32, i32) {
    %c0_i32 = arith.constant 0 : i32
    %c0_i32_0 = arith.constant 0 : i32
    %c0_i32_1 = arith.constant 0 : i32
    return %c0_i32, %c0_i32_0 : i32, i32
  }
  func.func @transform_5(%arg0: i32, %arg1: i32) -> (i32, i32, i32) {
    %c0_i32 = arith.constant 0 : i32
    %c0_i32_0 = arith.constant 0 : i32
    %c0_i32_1 = arith.constant 0 : i32
    return %arg0, %c0_i32, %c0_i32_0 : i32, i32, i32
  }
}

</mosaic_0001>

<llo_original>
// kernel: tpu_custom_call.1
$region0: #{tpu_custom_call.1}
  #allocation0 [shape = 'u32[]', space=smem, size = 0x4, offset = 0x4, fixed_abs, tag = 'smem constant byte address 0x4 - core index']
  #allocation1 [shape = 'u32[72,128]{1,0:T(1,128)}', space=vmem, size = 0x9000, scoped, tag = 'internal scratch']
  #allocation2 [shape = 'f32[4,1]{1,0:T(4,128)}', space=vmem, size = 0x800, scoped, tag = 'scratch operand']
  #allocation3 [shape = 'f32[4,1]{1,0:T(4,128)}', space=vmem, size = 0x800, scoped, tag = 'scratch operand']
  %s0 = inlined_call_operand.hbm [shape: f32[2,4,256], index: 0, kind: input, shape index: {}]
  %s1 = inlined_call_operand.vmem [shape: f32[4,4], index: 1, kind: input, shape index: {}]
  %s2 = inlined_call_operand.vmem [shape: f32[4,1], index: 2, kind: input, shape index: {}]
  %s3 = inlined_call_operand.vmem [shape: f32[4,4], index: 3, kind: input, shape index: {}]
  %s4 = inlined_call_operand.vmem [shape: f32[4,1], index: 4, kind: input, shape index: {}]
  %s5 = inlined_call_operand.vmem [shape: f32[2,4,1], index: 5, kind: output, shape index: {}]
  %s6 = sld [smem:[#allocation0]]
  $region65: #{tpu_custom_call.1} parent=0
    _
  %s8 = ssub.s32 1, %s6
  %s9 = scalar_select 0, %s8, %s6
  $region1: #{tpu_custom_call.1} parent=0
    #allocation4 [shape = 'u8[8192]{0}', space=vmem, size = 0x2000, scoped, tag = 'input window, operand 0']
    #allocation5 [shape = 's32[2]{0}', space=sflag, size = 0x8, scoped, tag = 'scoped memory for tpu_custom_call.1']
    %10 = vsyncpa [#allocation5], 0
    %s11 = scalar_lea.sflag [#allocation5], 1
    %12 = vsyncpa %s11, 0
    loop: start=0, step=1, limit=4
    $region2: #{tpu_custom_call.1} parent=1 // loop_pre_header
      _
    $region3: #{tpu_custom_call.1} parent=1 // loop_header
      %s14 = sphi 0, %s18
      %p15 = scmp.ge.s32.totalorder %s14, 4
      %s21 = sphi 0, %s33
      %s22 = sphi 0, %s29
      %s23 = sphi 0, %s21
      %s24 = sphi 0, %s22
      %s25 = sphi 0, %s23
      %s26 = sphi 0, %s24
      %s38 = sphi 0, %s40
      %s41 = sphi 0, %s38
      %s42 = sphi 0, %s41
      %s58 = sphi 0, %s42
      %s62 = sphi 0, %s62
      %s64 = sphi 0, %s62
      %s65 = sphi 0, %s64
      %s79 = sphi 0, %s65
      %s83 = sphi 0, %s83
      %s85 = sphi 0, %s83
      %s86 = sphi 0, %s85
      %s100 = sphi 0, %s86
      %s104 = sphi 0, %s104
      %s106 = sphi 0, %s104
      %s107 = sphi 0, %s106
      %s121 = sphi 0, %s107
      %s125 = sphi 0, %s125
      %s127 = sphi 0, %s125
      %s128 = sphi 0, %s127
      %s142 = sphi 0, %s128
      %s148 = sphi 0, %s150
      %s151 = sphi 0, %s148
      %s152 = sphi 0, %s151
      %s168 = sphi 0, %s152
    $region4: #{tpu_custom_call.1} parent=1 // loop_header_branch
      %17 = sbr.rel (%p15) target = $region8
    $region5: #{tpu_custom_call.1} parent=1 // loop_body
      %s19 = ssub.s32 %s14, 1
      %s20 = ssub.s32 %s14, 2
      %s27 = sadd.s32 1, %s22
      %p28 = scmp.ge.s32.totalorder %s27, 1
      %s29 = scalar_select %p28, 0, %s27
      %s30 = sadd.s32 1, %s21
      %s31 = scalar_select %p28, %s30, %s21
      %p32 = scmp.ge.s32.totalorder %s31, 2
      %s33 = scalar_select %p32, 0, %s31
      %s34 = ssub.s32 %s21, %s33
      %s35 = ssub.s32 %s22, %s29
      %s36 = sor.u32 %s34, %s35
      %p37 = scmp.eq.s32.totalorder %s36, 0
      %s39 = sadd.s32 %s38, 1
      %s40 = scalar_select %p37, %s38, %s39
      %p43 = pneg %p37
      %p44 = scmp.eq.s32.totalorder %s14, 1
      %p45 = por %p43, %p44
      %p46 = scmp.ne.s32.totalorder %s38, %s41
      %p47 = scmp.eq.s32.totalorder %s14, 0
      %p48 = por %p46, %p47
      %p49 = scmp.ne.s32.totalorder %s38, %s41
      %p50 = scmp.eq.s32.totalorder %s19, 1
      %p51 = por %p49, %p50
      %p52 = scmp.ne.s32.totalorder %s41, %s42
      %p53 = scmp.eq.s32.totalorder %s19, 0
      %p54 = por %p52, %p53
      %p55 = scmp.ne.s32.totalorder %s41, %s42
      %p56 = scmp.eq.s32.totalorder %s20, 1
      %p57 = por %p55, %p56
      %p59 = scmp.ne.s32.totalorder %s42, %s58
      %p60 = scmp.eq.s32.totalorder %s20, 0
      %p61 = por %p59, %p60
      %s63 = sadd.s32 %s62, 1
      %p66 = scmp.eq.s32.totalorder %s14, 1
      %p67 = scmp.ne.s32.totalorder %s62, %s64
      %p68 = scmp.eq.s32.totalorder %s14, 0
      %p69 = por %p67, %p68
      %p70 = scmp.ne.s32.totalorder %s62, %s64
      %p71 = scmp.eq.s32.totalorder %s19, 1
      %p72 = por %p70, %p71
      %p73 = scmp.ne.s32.totalorder %s64, %s65
      %p74 = scmp.eq.s32.totalorder %s19, 0
      %p75 = por %p73, %p74
      %p76 = scmp.ne.s32.totalorder %s64, %s65
      %p77 = scmp.eq.s32.totalorder %s20, 1
      %p78 = por %p76, %p77
      %p80 = scmp.ne.s32.totalorder %s65, %s79
      %p81 = scmp.eq.s32.totalorder %s20, 0
      %p82 = por %p80, %p81
      %s84 = sadd.s32 %s83, 1
      %p87 = scmp.eq.s32.totalorder %s14, 1
      %p88 = scmp.ne.s32.totalorder %s83, %s85
      %p89 = scmp.eq.s32.totalorder %s14, 0
      %p90 = por %p88, %p89
      %p91 = scmp.ne.s32.totalorder %s83, %s85
      %p92 = scmp.eq.s32.totalorder %s19, 1
      %p93 = por %p91, %p92
      %p94 = scmp.ne.s32.totalorder %s85, %s86
      %p95 = scmp.eq.s32.totalorder %s19, 0
      %p96 = por %p94, %p95
      %p97 = scmp.ne.s32.totalorder %s85, %s86
      %p98 = scmp.eq.s32.totalorder %s20, 1
      %p99 = por %p97, %p98
      %p101 = scmp.ne.s32.totalorder %s86, %s100
      %p102 = scmp.eq.s32.totalorder %s20, 0
      %p103 = por %p101, %p102
      %s105 = sadd.s32 %s104, 1
      %p108 = scmp.eq.s32.totalorder %s14, 1
      %p109 = scmp.ne.s32.totalorder %s104, %s106
      %p110 = scmp.eq.s32.totalorder %s14, 0
      %p111 = por %p109, %p110
      %p112 = scmp.ne.s32.totalorder %s104, %s106
      %p113 = scmp.eq.s32.totalorder %s19, 1
      %p114 = por %p112, %p113
      %p115 = scmp.ne.s32.totalorder %s106, %s107
      %p116 = scmp.eq.s32.totalorder %s19, 0
      %p117 = por %p115, %p116
      %p118 = scmp.ne.s32.totalorder %s106, %s107
      %p119 = scmp.eq.s32.totalorder %s20, 1
      %p120 = por %p118, %p119
      %p122 = scmp.ne.s32.totalorder %s107, %s121
      %p123 = scmp.eq.s32.totalorder %s20, 0
      %p124 = por %p122, %p123
      %s126 = sadd.s32 %s125, 1
      %p129 = scmp.eq.s32.totalorder %s14, 1
      %p130 = scmp.ne.s32.totalorder %s125, %s127
      %p131 = scmp.eq.s32.totalorder %s14, 0
      %p132 = por %p130, %p131
      %p133 = scmp.ne.s32.totalorder %s125, %s127
      %p134 = scmp.eq.s32.totalorder %s19, 1
      %p135 = por %p133, %p134
      %p136 = scmp.ne.s32.totalorder %s127, %s128
      %p137 = scmp.eq.s32.totalorder %s19, 0
      %p138 = por %p136, %p137
      %p139 = scmp.ne.s32.totalorder %s127, %s128
      %p140 = scmp.eq.s32.totalorder %s20, 1
      %p141 = por %p139, %p140
      %p143 = scmp.ne.s32.totalorder %s128, %s142
      %p144 = scmp.eq.s32.totalorder %s20, 0
      %p145 = por %p143, %p144
      %s146 = ssub.s32 %s21, %s33
      %p147 = scmp.eq.s32.totalorder %s146, 0
      %s149 = sadd.s32 %s148, 1
      %s150 = scalar_select %p147, %s148, %s149
      %p153 = pneg %p147
      %p154 = scmp.eq.s32.totalorder %s14, 1
      %p155 = por %p153, %p154
      %p156 = scmp.ne.s32.totalorder %s148, %s151
      %p157 = scmp.eq.s32.totalorder %s14, 0
      %p158 = por %p156, %p157
      %p159 = scmp.ne.s32.totalorder %s148, %s151
      %p160 = scmp.eq.s32.totalorder %s19, 1
      %p161 = por %p159, %p160
      %p162 = scmp.ne.s32.totalorder %s151, %s152
      %p163 = scmp.eq.s32.totalorder %s19, 0
      %p164 = por %p162, %p163
      %p165 = scmp.ne.s32.totalorder %s151, %s152
      %p166 = scmp.eq.s32.totalorder %s20, 1
      %p167 = por %p165, %p166
      %p169 = scmp.ne.s32.totalorder %s152, %s168
      %p170 = scmp.eq.s32.totalorder %s20, 0
      %p171 = por %p169, %p170
      %p172 = scmp.le.s32.totalorder 1, %s14
      %p173 = scmp.lt.s32.totalorder %s14, 3
      %p174 = pnand %p172, %p173
      %p175 = pneg %p174
      // Predicated region
      $region9: #{tpu_custom_call.1} parent=5 // pred_check
        _
      $region10: #{tpu_custom_call.1} parent=5 // pred_check_branch
        %177 = sbr.rel (%p174) target = $region12
      $region11: #{tpu_custom_call.1} parent=5 // pred_region
        %s178 = ssub.s32 %s14, 1
        // Predicated region
        $region13: #{tpu_custom_call.1} parent=11 // pred_check
          %p179 = pneg %p75
        $region14: #{tpu_custom_call.1} parent=11 // pred_check_branch
          %181 = sbr.rel (%p179) target = $region16
        $region15: #{tpu_custom_call.1} parent=11 // pred_region
          _
        $region16: #{tpu_custom_call.1} parent=11 // pred_fallthru
          _
        // Predicated region
        $region17: #{tpu_custom_call.1} parent=11 // pred_check
          %p182 = pneg %p96
        $region18: #{tpu_custom_call.1} parent=11 // pred_check_branch
          %184 = sbr.rel (%p182) target = $region20
        $region19: #{tpu_custom_call.1} parent=11 // pred_region
          _
        $region20: #{tpu_custom_call.1} parent=11 // pred_fallthru
          _
        // Predicated region
        $region21: #{tpu_custom_call.1} parent=11 // pred_check
          %p185 = pneg %p117
        $region22: #{tpu_custom_call.1} parent=11 // pred_check_branch
          %187 = sbr.rel (%p185) target = $region24
        $region23: #{tpu_custom_call.1} parent=11 // pred_region
          _
        $region24: #{tpu_custom_call.1} parent=11 // pred_fallthru
          _
        // Predicated region
        $region25: #{tpu_custom_call.1} parent=11 // pred_check
          %p188 = pneg %p138
        $region26: #{tpu_custom_call.1} parent=11 // pred_check_branch
          %190 = sbr.rel (%p188) target = $region28
        $region27: #{tpu_custom_call.1} parent=11 // pred_region
          _
        $region28: #{tpu_custom_call.1} parent=11 // pred_fallthru
          _
      $region12: #{tpu_custom_call.1} parent=5 // pred_fallthru
        _
      %p191 = scmp.lt.s32.totalorder %s14, 2
      // Predicated region
      $region29: #{tpu_custom_call.1} parent=5 // pred_check
        %p192 = pneg %p191
      $region30: #{tpu_custom_call.1} parent=5 // pred_check_branch
        %194 = sbr.rel (%p192) target = $region32
      $region31: #{tpu_custom_call.1} parent=5 // pred_region
        // Predicated region
        $region33: #{tpu_custom_call.1} parent=31 // pred_check
          %p195 = pneg %p48
        $region34: #{tpu_custom_call.1} parent=31 // pred_check_branch
          %197 = sbr.rel (%p195) target = $region36
        $region35: #{tpu_custom_call.1} parent=31 // pred_region
          %s198 = sand.u32 %s38, 1
          %s199 = scalar_lea.sflag [#allocation5], %s198
          %s200 = sand.u32 %s38, 1
          %s201 = smul.addr %s200, 8
          %s202 = scalar_lea.vmem [#allocation4], %s201
          %s203 = smul.u32 2, %s22
          %205 = vsyncadd %s199, 0
          %s206 = smul.addr %s21, 2
          %s207 = sadd.s32 %s203, %s206
          %s208 = smul.addr %s207, 4
          %s209 = scalar_lea.hbm %s0, %s208
          %s211 = sshll.u32 %s209, 4
          %s212 = int_to_ptr.hbm [resolvable:$true] %s211
          %s213 = sshll.u32 %s202, 4
          %s214 = int_to_ptr.vmem [resolvable:$true] %s213
          %216 = dma.hbm_to_vmem [thread:$0]  %s212, 128, %s214, %s199
        $region36: #{tpu_custom_call.1} parent=31 // pred_fallthru
          _
      $region32: #{tpu_custom_call.1} parent=5 // pred_fallthru
        _
      %p217 = scmp.le.s32.totalorder 1, %s14
      %p218 = scmp.lt.s32.totalorder %s14, 3
      %p219 = pnand %p217, %p218
      %p220 = pneg %p219
      // Predicated region
      $region37: #{tpu_custom_call.1} parent=5 // pred_check
        _
      $region38: #{tpu_custom_call.1} parent=5 // pred_check_branch
        %222 = sbr.rel (%p219) target = $region40
      $region39: #{tpu_custom_call.1} parent=5 // pred_region
        %s223 = ssub.s32 %s14, 1
        %s224 = sand.u32 %s41, 1
        %s225 = scalar_lea.sflag [#allocation5], %s224
        %s226 = sand.u32 %s41, 1
        %s227 = smul.addr %s226, 8
        %s228 = scalar_lea.vmem [#allocation4], %s227
        // Predicated region
        $region41: #{tpu_custom_call.1} parent=39 // pred_check
          %p229 = pneg %p54
        $region42: #{tpu_custom_call.1} parent=39 // pred_check_branch
          %231 = sbr.rel (%p229) target = $region44
        $region43: #{tpu_custom_call.1} parent=39 // pred_region
          %233 = dma.done %s225, 128
        $region44: #{tpu_custom_call.1} parent=39 // pred_fallthru
          _
        %s234 = sand.u32 %s41, 1
        %s235 = scalar_lea.sflag [#allocation5], %s234
        %s236 = sand.u32 %s41, 1
        %s237 = smul.addr %s236, 8
        %s238 = scalar_lea.vmem [#allocation4], %s237
        %p239 = pneg %p54
        %p240 = pneg %p51
        %p241 = pneg %p75
        %p242 = pneg %p72
        %p243 = pneg %p96
        %p244 = pneg %p93
        %p245 = pneg %p117
        %p246 = pneg %p114
        %p247 = pneg %p138
        %p248 = pneg %p135
        %p249 = pneg %p164
        %p250 = pneg %p161
        %p251 = scmp.lt.s32.totalorder %s23, 1
        %s252 = scalar_select %p251, %s23, 1
        %s253 = smul.addr %s252, 4
        %s254 = scalar_lea.vmem %s5, %s253
        %s255 = smul.u32 2, %s24
        %p256 = scmp.lt.s32.totalorder %s23, 1
        %s257 = scalar_select %p256, %s23, 1
        %s258 = smul.addr %s257, 4
        %s259 = scalar_lea.vmem %s5, %s258
        %v260 = vld [vmem:[%s228] sm:$0xff]
        %p261 = scmp.eq.s32.totalorder %s24, 0
        // Predicated region
        $region45: #{tpu_custom_call.1} parent=39 // pred_check
          %p262 = pneg %p261
        $region46: #{tpu_custom_call.1} parent=39 // pred_check_branch
          %264 = sbr.rel (%p262) target = $region48
        $region47: #{tpu_custom_call.1} parent=39 // pred_region
          %vm265 = vcmask 3072
          %266 = vst.msk [vmem:[#allocation2] sm:$0xf] %vm265, 0.0
          %267 = vst.msk [vmem:[#allocation3] sm:$0xf] %vm265, -inf
        $region48: #{tpu_custom_call.1} parent=39 // pred_fallthru
          _
        %v268 = vld [vmem:[#allocation2] sm:$0xf]
        %270 = vst [vmem:[#allocation1] ss:$2 sm:$0xff] %v260
        %v271 = vld.sshfl [vmem:[#allocation1] sm:$0xff pattern:$0x75316420]
        %v272 = vld.sshfl [vmem:[#allocation1 + $0x8] sm:$0xff pattern:$0x75316420]
        %vm275 = vcmask 1043456
        %v276 = vsel %vm275, %v271, 0.0
        %v277 = vsel %vm275, %v272, 0.0
        %v278 = vadd.f32 %v276, %v277
        %279 = vadd.xlane.f32.xlu0 %v278
        %v280 = vpop.xlane.xlu0 %279
        %v281 = vadd.f32 %v268, %v280
        %vm282 = vcmask 3072
        %283 = vst.msk [vmem:[#allocation2] sm:$0xf] %vm282, %v281
        %v284 = vld [vmem:[#allocation3] sm:$0xf]
        %285 = vst [vmem:[#allocation1] ss:$2 sm:$0xff] %v260
        %v286 = vld.sshfl [vmem:[#allocation1] sm:$0xff pattern:$0x75316420]
        %v287 = vld.sshfl [vmem:[#allocation1 + $0x8] sm:$0xff pattern:$0x75316420]
        %v290 = vsel %vm275, %v286, -inf
        %v291 = vsel %vm275, %v287, -inf
        %v292 = vmax.f32 %v290, %v291
        %293 = vmax.xlane.f32.xlu0 %v292
        %v294 = vpop.xlane.xlu0 %293
        %v295 = vmax.f32 %v284, %v294
        %296 = vst.msk [vmem:[#allocation3] sm:$0xf] %vm282, %v295
        // Predicated region
        $region49: #{tpu_custom_call.1} parent=39 // pred_check
          %p297 = pneg %p261
        $region50: #{tpu_custom_call.1} parent=39 // pred_check_branch
          %299 = sbr.rel (%p297) target = $region52
        $region51: #{tpu_custom_call.1} parent=39 // pred_region
          %v300 = vld [vmem:[#allocation2] sm:$0xf]
          %v301 = vmul.f32 %v300, 0.00390625
          %v302 = vld [vmem:[#allocation3] sm:$0xf]
          %v303 = vlaneseq
          %v304 = vand.u32 %v303, 127
          %vm305 = vcmp.eq.s32.totalorder %v304, 0
          %307 = vset.pattern.permute.xlu0 0
          %308 = vperm.xlu0 %307, %v301
          %v309 = vpop.permute.xlu0 %308
          %312 = vset.pattern.permute.xlu0 0
          %313 = vperm.xlu0 %312, %v302
          %v314 = vpop.permute.xlu0 %313
          %v316 = vsel %vm305, %v309, %v314
          %v317 = vld [vmem:[%s1] sm:$0xf]
          %v318 = vld [vmem:[%s2] sm:$0xf]
          %v319 = vld [vmem:[%s3] sm:$0xf]
          %v320 = vld [vmem:[%s4] sm:$0xf]
          %322 = vset.pattern.permute.xlu0 0
          %323 = vperm.xlu0 %322, %v318
          %v324 = vpop.permute.xlu0 %323
          %vm326 = vcmask 31744
          %v328 = vsel %vm326, %v317, 0
          %v331 = vsel %vm275, %v316, 0
          %333 = vmatpush.msra.mxu0 0.0
          %334 = vmatpush.msra.mxu0 0.0
          %335 = vmatpush.msra.mxu0 0.0
          %336 = vmatpush.msra.mxu0 0.0
          %337 = vmatpush.msra.mxu0 0.0
          %338 = vmatpush.msra.mxu0 0.0
          %339 = vmatpush.msra.mxu0 0.0
          %340 = vmatpush.msra.mxu0 0.0
          %341 = vmatpush.msra.mxu0 0.0
          %342 = vmatpush.msra.mxu0 0.0
          %343 = vmatpush.msra.mxu0 0.0
          %344 = vmatpush.msra.mxu0 0.0
          %345 = vmatpush.msra.mxu0 0.0
          %346 = vmatpush.msra.mxu0 0.0
          %347 = vmatpush.msra.mxu0 0.0
          %348 = vmatpush.msra.mxu0 %v331
          %349 = vmatmul.f32.gmra.mxu0 %v328
          %v350 = vpop.f32.mrf.mxu0
          %v351 = vadd.f32 %v324, %v350
          %352 = vdwg.mxu0
          %v353 = vmax.f32 %v351, 0.0
          %355 = vset.pattern.permute.xlu0 0
          %356 = vperm.xlu0 %355, %v320
          %v357 = vpop.permute.xlu0 %356
          %v360 = vsel %vm326, %v319, 0
          %v363 = vsel %vm275, %v353, 0
          %365 = vmatpush.msra.mxu0 0.0
          %366 = vmatpush.msra.mxu0 0.0
          %367 = vmatpush.msra.mxu0 0.0
          %368 = vmatpush.msra.mxu0 0.0
          %369 = vmatpush.msra.mxu0 0.0
          %370 = vmatpush.msra.mxu0 0.0
          %371 = vmatpush.msra.mxu0 0.0
          %372 = vmatpush.msra.mxu0 0.0
          %373 = vmatpush.msra.mxu0 0.0
          %374 = vmatpush.msra.mxu0 0.0
          %375 = vmatpush.msra.mxu0 0.0
          %376 = vmatpush.msra.mxu0 0.0
          %377 = vmatpush.msra.mxu0 0.0
          %378 = vmatpush.msra.mxu0 0.0
          %379 = vmatpush.msra.mxu0 0.0
          %380 = vmatpush.msra.mxu0 %v363
          %381 = vmatmul.f32.gmra.mxu0 %v360
          %v382 = vpop.f32.mrf.mxu0
          %v383 = vadd.f32 %v357, %v382
          %384 = vdwg.mxu0
          %386 = vrot.lane.b32.xlu0 %v383, 127
          %v387 = vpop.permute.xlu0 %386
          %v389 = vadd.f32 %v383, %v387
          %v390 = vxor.u32 %v389, 2147483648
          %v391 = vmul.f32 %v390, 1.442695
          %v392 = vpow.pop %v391
          %v393 = vadd.f32 %v392, 1.0
          %v394 = vrcp.pop %v393
          %v395 = vmul.f32 %v393, %v394
          %v396 = vsub.f32 1.0, %v395
          %v397 = vmul.f32 %v394, %v396
          %v398 = vadd.f32 %v394, %v397
          %vm399 = vweird.f32 %v393
          %vm400 = vweird.f32 %v394
          %vm401 = vmor %vm399, %vm400
          %v402 = vsel %vm401, %v394, %v398
          %v403 = vand.u32 2147483647, %v393
          %vm404 = vcmp.eq.f32.partialorder %v403, 8.507059e+37
          %v405 = vand.u32 %v393, 2147483648
          %v406 = vor.u32 1.1754944e-38, %v405
          %v407 = vsel %vm404, %v406, %v402
          %v408 = vmul.f32 1.0, %v407
          %409 = vst.msk [vmem:[%s259] sm:$0xf] %vm282, %v408
        $region52: #{tpu_custom_call.1} parent=39 // pred_fallthru
          _
        %p410 = scmp.lt.s32.totalorder %s23, 1
        %s411 = scalar_select %p410, %s23, 1
        %s412 = smul.addr %s411, 4
        %s413 = scalar_lea.vmem %s5, %s412
        // Predicated region
        $region53: #{tpu_custom_call.1} parent=39 // pred_check
          %p414 = pneg %p161
        $region54: #{tpu_custom_call.1} parent=39 // pred_check_branch
          %416 = sbr.rel (%p414) target = $region56
        $region55: #{tpu_custom_call.1} parent=39 // pred_region
          _
        $region56: #{tpu_custom_call.1} parent=39 // pred_fallthru
          _
      $region40: #{tpu_custom_call.1} parent=5 // pred_fallthru
        _
      %p417 = scmp.le.s32.totalorder 2, %s14
      // Predicated region
      $region57: #{tpu_custom_call.1} parent=5 // pred_check
        %p418 = pneg %p417
      $region58: #{tpu_custom_call.1} parent=5 // pred_check_branch
        %420 = sbr.rel (%p418) target = $region60
      $region59: #{tpu_custom_call.1} parent=5 // pred_region
        %s421 = ssub.s32 %s14, 2
        // Predicated region
        $region61: #{tpu_custom_call.1} parent=59 // pred_check
          %p422 = pneg %p167
        $region62: #{tpu_custom_call.1} parent=59 // pred_check_branch
          %424 = sbr.rel (%p422) target = $region64
        $region63: #{tpu_custom_call.1} parent=59 // pred_region
          %p425 = scmp.lt.s32.totalorder %s25, 1
          %s426 = scalar_select %p425, %s25, 1
          %s427 = smul.addr %s426, 4
          %s428 = scalar_lea.vmem %s5, %s427
        $region64: #{tpu_custom_call.1} parent=59 // pred_fallthru
          _
      $region60: #{tpu_custom_call.1} parent=5 // pred_fallthru
        _
    $region6: #{tpu_custom_call.1} parent=1 // loop_footer
      %s18 = sadd.s32 1, %s14
    $region7: #{tpu_custom_call.1} parent=1 // loop_footer_branch
      %13 = sbr.rel target = $region3
    $region8: #{tpu_custom_call.1} parent=1 // loop_exit
      _
    %429 = vsyncpa [#allocation5], 1
    %s430 = scalar_lea.sflag [#allocation5], 1
    %431 = vsyncpa %s430, 1

</llo_original>
